<compile_context>
chip_gen: v6e
topology: v6e:2x2x1
jax: 0.10.0
libtpu: 0.0.40
codegen_flags: <defaults>
</compile_context>

<pallas_src>
import jax
import jax.numpy as jnp
import numpy as np
from jax.experimental import pallas as pl
from jax.experimental.pallas import tpu as pltpu


# ----------------------------------------------------------------------------
# Fused kernel: 4x FFN('lll') + gaussian KLD (per-row) + reparameterized z
# ----------------------------------------------------------------------------
def latent_fused_kernel(x_ref, xp_ref, eps_ref,
                        w1_ref, b1_ref, w2_ref, b2_ref, w3_ref, b3_ref,
                        z_ref, kld_ref):
    x = x_ref[...]        # (tile, H) f32
    xp = xp_ref[...]      # (tile, H) f32

    # In-kernel torch.cat((x_p, x), -1); one K=2H matmul instead of two K=H.
    cat = jnp.concatenate([xp, x], axis=-1).astype(jnp.bfloat16)        # (tile, 2H)

    # --- layer 1 of all four heads (stacked W1, lane-dense 4F output) ---
    h = jnp.dot(cat, w1_ref[...], preferred_element_type=jnp.float32)
    h = jnp.maximum(h + b1_ref[...], 0.0)                               # (tile, 4F) f32

    # --- layer 2 (block-diagonal) ---
    h = jnp.dot(h.astype(jnp.bfloat16), w2_ref[...],
                preferred_element_type=jnp.float32)
    h = jnp.maximum(h + b2_ref[...], 0.0)                               # (tile, 4F) f32

    # --- layer 3 (block-diagonal) -> packed [mean | log_var | mean_p | log_var_p]
    out = jnp.dot(h.astype(jnp.bfloat16), w3_ref[...],
                  preferred_element_type=jnp.float32) + b3_ref[...]     # (tile, 4H) f32

    hd = z_ref.shape[-1]
    m = out[:, 0 * hd:1 * hd]
    lv = out[:, 1 * hd:2 * hd]
    mp = out[:, 2 * hd:3 * hd]
    lvp = out[:, 3 * hd:4 * hd]

    # gaussian_kld(mean_p, log_var_p, mean, log_var), summed over hidden dim.
    # All f32; exp(-log_var) reused for both variance terms (3 EUP exps/elem).
    inv_exp_lv = jnp.exp(-lv)
    term = (1.0 + (lvp - lv)
            - jnp.square(m - mp) * inv_exp_lv
            - jnp.exp(lvp) * inv_exp_lv)
    kld_ref[...] = -0.5 * jnp.sum(term, axis=-1, keepdims=True)         # (tile, 1)

    # z = eps * exp(0.5 * log_var_p) + mean_p   (f32 elementwise)
    z_ref[...] = eps_ref[...] * jnp.exp(0.5 * lvp) + mp


# ----------------------------------------------------------------------------
# Weight packing: four FFN heads -> lane-dense / block-diagonal bf16 slabs
# ----------------------------------------------------------------------------
def pack_params(params, hidden):
    (w1m, b1m), (w2m, b2m), (w3m, b3m) = params["mean"]
    (w1v, b1v), (w2v, b2v), (w3v, b3v) = params["var"]
    (w1mp, b1mp), (w2mp, b2mp), (w3mp, b3mp) = params["mean_p"]
    (w1vp, b1vp), (w2vp, b2vp), (w3vp, b3vp) = params["var_p"]

    filt = w1m.shape[1]
    zeros = jnp.zeros((hidden, filt), jnp.float32)
    # Stacked layer-1 weight for the in-kernel cat(x_p, x):
    #   rows [0:H] multiply x_p, rows [H:2H] multiply x.
    #   mean / var heads consume only x -> zero x_p rows.
    w1 = jnp.concatenate([
        jnp.concatenate([zeros, w1m], axis=0),
        jnp.concatenate([zeros, w1v], axis=0),
        w1mp,
        w1vp], axis=1)                                                   # (2H, 4F)
    b1 = jnp.concatenate([b1m, b1v, b1mp, b1vp], axis=1)                 # (1, 4F)
    # Layers 2/3: block-diagonal so all four heads ride one lane-dense matmul.
    w2 = jax.scipy.linalg.block_diag(w2m, w2v, w2mp, w2vp)               # (4F, 4F)
    b2 = jnp.concatenate([b2m, b2v, b2mp, b2vp], axis=1)                 # (1, 4F)
    w3 = jax.scipy.linalg.block_diag(w3m, w3v, w3mp, w3vp)               # (4F, 4H)
    b3 = jnp.concatenate([b3m, b3v, b3mp, b3vp], axis=1)                 # (1, 4H)

    cast = lambda a: a.astype(jnp.bfloat16)   # MXU operands only; biases stay f32
    return cast(w1), b1, cast(w2), b2, cast(w3), b3


# ----------------------------------------------------------------------------
# Latent.forward
# ----------------------------------------------------------------------------
def latent_forward(x, x_p, params, eps, *, row_tile=2048):
    B, T, H = x.shape
    N = B * T

    x2 = x.reshape(N, H)
    xp2 = x_p.reshape(N, H)
    eps2 = eps.reshape(N, H)

    # Row tile: big (amortize grid-step overhead), multiple of 8, and split so
    # there are >=2 grid steps when possible (v7x has 2 TensorCores per chip).
    tile = min(row_tile, N)
    if tile == N and N >= 16:
        tile = N // 2
    tile = max(8, (tile // 8) * 8)
    n_tiles = (N + tile - 1) // tile   # partial tail block: OOB writes clipped,
                                       # garbage rows never escape (row-local math).

    w1, b1, w2, b2, w3, b3 = pack_params(params, H)
    f4 = w1.shape[1]                   # 4 * filter

    row_spec = pl.BlockSpec((tile, H), lambda i: (i, 0))

    def const_spec(a):
        # Full-array block; weights/biases stay resident in VMEM across tiles.
        return pl.BlockSpec(a.shape, lambda i: (0, 0))

    flops_per_row = 2 * (2 * H * f4 + f4 * f4 + f4 * 4 * H)
    cost = pl.CostEstimate(
        flops=N * flops_per_row,
        transcendentals=N * 3 * H,
        bytes_accessed=(3 * N * H * 4) + (N * (H + 1) * 4)
                       + 2 * (w1.size + w2.size + w3.size)
                       + 4 * (b1.size + b2.size + b3.size),
    )

    z, kld_rows = pl.pallas_call(
        latent_fused_kernel,
        out_shape=(jax.ShapeDtypeStruct((N, H), jnp.float32),
                   jax.ShapeDtypeStruct((N, 1), jnp.float32)),
        grid=(n_tiles,),
        in_specs=[row_spec, row_spec, row_spec,
                  const_spec(w1), const_spec(b1),
                  const_spec(w2), const_spec(b2),
                  const_spec(w3), const_spec(b3)],
        out_specs=(pl.BlockSpec((tile, H), lambda i: (i, 0)),
                   pl.BlockSpec((tile, 1), lambda i: (i, 0))),
        compiler_params=pltpu.CompilerParams(
            dimension_semantics=("parallel",),
            vmem_limit_bytes=32 * 1024 * 1024),
        cost_estimate=cost,
    )(x2, xp2, eps2, w1, b1, w2, b2, w3, b3)

    kld = jnp.sum(kld_rows[:, 0]) / N          # mean over positions
    return kld, z.reshape(B, T, H)


# ----------------------------------------------------------------------------
# Deterministic parameter init (nn.Linear-style uniform), synthetic weights
# ----------------------------------------------------------------------------
def init_ffn(key, d_in, d_filter, d_out):
    def lin(k, i, o):
        kw, kb = jax.random.split(k)
        s = 1.0 / np.sqrt(i)
        w = jax.random.uniform(kw, (i, o), minval=-s, maxval=s, dtype=jnp.float32)
        b = jax.random.uniform(kb, (1, o), minval=-s, maxval=s, dtype=jnp.float32)
        return w, b
    k1, k2, k3 = jax.random.split(key, 3)
    return (lin(k1, d_in, d_filter), lin(k2, d_filter, d_filter), lin(k3, d_filter, d_out))


# ----------------------------------------------------------------------------
# Pure-JAX reference (unfused f32, explicit concat) for correctness check
# ----------------------------------------------------------------------------
def ref_ffn3(xv, p):
    (w1, b1), (w2, b2), (w3, b3) = p
    h = jnp.maximum(xv @ w1 + b1, 0.0)
    h = jnp.maximum(h @ w2 + b2, 0.0)
    return h @ w3 + b3


def ref_forward(x, x_p, params, eps):
    B, T, H = x.shape
    x2 = x.reshape(-1, H)
    xp2 = x_p.reshape(-1, H)
    cat = jnp.concatenate([xp2, x2], axis=-1)
    mean = ref_ffn3(x2, params["mean"])
    log_var = ref_ffn3(x2, params["var"])
    mean_p = ref_ffn3(cat, params["mean_p"])
    log_var_p = ref_ffn3(cat, params["var_p"])
    kld = -0.5 * jnp.sum(
        1.0 + (log_var_p - log_var)
        - jnp.square(mean - mean_p) / jnp.exp(log_var)
        - jnp.exp(log_var_p) / jnp.exp(log_var), axis=-1)
    kld_loss = jnp.mean(kld)
    z = eps.reshape(-1, H) * jnp.exp(0.5 * log_var_p) + mean_p
    return kld_loss, z.reshape(B, T, H)


if __name__ == "__main__":
    key = jax.random.PRNGKey(0)
    B, T, H, FILT = 2, 8, 32, 64
    k_x, k_xp, k_eps, k1, k2, k3, k4 = jax.random.split(key, 7)

    x = jax.random.normal(k_x, (B, T, H), dtype=jnp.float32)
    x_p = jax.random.normal(k_xp, (B, T, H), dtype=jnp.float32)
    # torch.randn(x.size()) in the module; passed in explicitly for determinism.
    eps = jax.random.normal(k_eps, (B, T, H), dtype=jnp.float32)

    params = {
        "mean":   init_ffn(k1, H, FILT, H),
        "var":    init_ffn(k2, H, FILT, H),
        "mean_p": init_ffn(k3, 2 * H, FILT, H),
        "var_p":  init_ffn(k4, 2 * H, FILT, H),
    }

    kld, z = jax.jit(latent_forward)(x, x_p, params, eps)
    jax.block_until_ready((kld, z))

    # f32 reference vs bf16-MXU kernel: loosened tolerance.
    kld_ref, z_ref = ref_forward(x, x_p, params, eps)
    np.testing.assert_allclose(np.asarray(kld), np.asarray(kld_ref), rtol=2e-2, atol=2e-2)
    np.testing.assert_allclose(np.asarray(z), np.asarray(z_ref), rtol=2e-2, atol=2e-2)

    print("KERNEL_OK")
</pallas_src>

<mosaic_0001>
module attributes {stable_mosaic.version = 11 : i64} {
  func.func @latent_fused_kernel(%arg0: i32, %arg1: memref<8x32xf32, #tpu.memory_space<vmem>>, %arg2: memref<8x32xf32, #tpu.memory_space<vmem>>, %arg3: memref<8x32xf32, #tpu.memory_space<vmem>>, %arg4: memref<64x256xbf16, #tpu.memory_space<vmem>>, %arg5: memref<1x256xf32, #tpu.memory_space<vmem>>, %arg6: memref<256x256xbf16, #tpu.memory_space<vmem>>, %arg7: memref<1x256xf32, #tpu.memory_space<vmem>>, %arg8: memref<256x128xbf16, #tpu.memory_space<vmem>>, %arg9: memref<1x128xf32, #tpu.memory_space<vmem>>, %arg10: memref<8x32xf32, #tpu.memory_space<vmem>>, %arg11: memref<8x1xf32, #tpu.memory_space<vmem>>) attributes {dimension_semantics = [#tpu.dimension_semantics<parallel>], iteration_bounds = array<i64: 2>, scalar_prefetch = 0 : i64, scratch_operands = 0 : i64, tpu.core_type = #tpu.core_type<tc>, window_params = [{transform_indices = @transform_0, window_bounds = array<i64: 8, 32>}, {transform_indices = @transform_1, window_bounds = array<i64: 8, 32>}, {transform_indices = @transform_2, window_bounds = array<i64: 8, 32>}, {pipeline_mode = #tpu.pipeline_mode<synchronous>, transform_indices = @transform_3, window_bounds = array<i64: 64, 256>}, {pipeline_mode = #tpu.pipeline_mode<synchronous>, transform_indices = @transform_4, window_bounds = array<i64: 1, 256>}, {pipeline_mode = #tpu.pipeline_mode<synchronous>, transform_indices = @transform_5, window_bounds = array<i64: 256, 256>}, {pipeline_mode = #tpu.pipeline_mode<synchronous>, transform_indices = @transform_6, window_bounds = array<i64: 1, 256>}, {pipeline_mode = #tpu.pipeline_mode<synchronous>, transform_indices = @transform_7, window_bounds = array<i64: 256, 128>}, {pipeline_mode = #tpu.pipeline_mode<synchronous>, transform_indices = @transform_8, window_bounds = array<i64: 1, 128>}, {transform_indices = @transform_9, window_bounds = array<i64: 8, 32>}, {transform_indices = @transform_10, window_bounds = array<i64: 8, 1>}]} {
    %c0 = arith.constant 0 : index
    %c0_0 = arith.constant 0 : index
    %0 = vector.load %arg1[%c0, %c0_0] : memref<8x32xf32, #tpu.memory_space<vmem>>, vector<8x32xf32>
    %c0_1 = arith.constant 0 : index
    %c0_2 = arith.constant 0 : index
    %1 = vector.load %arg2[%c0_1, %c0_2] : memref<8x32xf32, #tpu.memory_space<vmem>>, vector<8x32xf32>
    %2 = tpu.concatenate %1, %0 in 1 : vector<8x32xf32>, vector<8x32xf32> -> vector<8x64xf32>
    %3 = arith.truncf %2 : vector<8x64xf32> to vector<8x64xbf16>
    %c0_3 = arith.constant 0 : index
    %c0_4 = arith.constant 0 : index
    %4 = vector.load %arg4[%c0_3, %c0_4] : memref<64x256xbf16, #tpu.memory_space<vmem>>, vector<64x256xbf16>
    %cst = arith.constant dense<0.000000e+00> : vector<8x256xf32>
    %5 = tpu.matmul %3, %4, %cst {dimension_numbers = #tpu.dot_dimension_numbers<[1], [0], [0], [1], [0, 0, 1, 1], [], []>} : vector<8x64xbf16>, vector<64x256xbf16>, vector<8x256xf32> -> vector<8x256xf32>
    %c0_5 = arith.constant 0 : index
    %c0_6 = arith.constant 0 : index
    %6 = vector.load %arg5[%c0_5, %c0_6] : memref<1x256xf32, #tpu.memory_space<vmem>>, vector<1x256xf32>
    %7 = vector.broadcast %6 : vector<1x256xf32> to vector<8x256xf32>
    %8 = arith.addf %5, %7 : vector<8x256xf32>
    %cst_7 = arith.constant 0.000000e+00 : f32
    %9 = vector.broadcast %cst_7 : f32 to vector<8x256xf32>
    %10 = arith.maximumf %8, %9 : vector<8x256xf32>
    %11 = arith.truncf %10 : vector<8x256xf32> to vector<8x256xbf16>
    %c0_8 = arith.constant 0 : index
    %c0_9 = arith.constant 0 : index
    %12 = vector.load %arg6[%c0_8, %c0_9] : memref<256x256xbf16, #tpu.memory_space<vmem>>, vector<256x256xbf16>
    %cst_10 = arith.constant dense<0.000000e+00> : vector<8x256xf32>
    %13 = tpu.matmul %11, %12, %cst_10 {dimension_numbers = #tpu.dot_dimension_numbers<[1], [0], [0], [1], [0, 0, 1, 1], [], []>} : vector<8x256xbf16>, vector<256x256xbf16>, vector<8x256xf32> -> vector<8x256xf32>
    %c0_11 = arith.constant 0 : index
    %c0_12 = arith.constant 0 : index
    %14 = vector.load %arg7[%c0_11, %c0_12] : memref<1x256xf32, #tpu.memory_space<vmem>>, vector<1x256xf32>
    %15 = vector.broadcast %14 : vector<1x256xf32> to vector<8x256xf32>
    %16 = arith.addf %13, %15 : vector<8x256xf32>
    %cst_13 = arith.constant 0.000000e+00 : f32
    %17 = vector.broadcast %cst_13 : f32 to vector<8x256xf32>
    %18 = arith.maximumf %16, %17 : vector<8x256xf32>
    %19 = arith.truncf %18 : vector<8x256xf32> to vector<8x256xbf16>
    %c0_14 = arith.constant 0 : index
    %c0_15 = arith.constant 0 : index
    %20 = vector.load %arg8[%c0_14, %c0_15] : memref<256x128xbf16, #tpu.memory_space<vmem>>, vector<256x128xbf16>
    %cst_16 = arith.constant dense<0.000000e+00> : vector<8x128xf32>
    %21 = tpu.matmul %19, %20, %cst_16 {dimension_numbers = #tpu.dot_dimension_numbers<[1], [0], [0], [1], [0, 0, 1, 1], [], []>} : vector<8x256xbf16>, vector<256x128xbf16>, vector<8x128xf32> -> vector<8x128xf32>
    %c0_17 = arith.constant 0 : index
    %c0_18 = arith.constant 0 : index
    %22 = vector.load %arg9[%c0_17, %c0_18] : memref<1x128xf32, #tpu.memory_space<vmem>>, vector<1x128xf32>
    %23 = vector.broadcast %22 : vector<1x128xf32> to vector<8x128xf32>
    %24 = arith.addf %21, %23 : vector<8x128xf32>
    %25 = vector.extract_strided_slice %24 {offsets = [0, 0], sizes = [8, 32], strides = [1, 1]} : vector<8x128xf32> to vector<8x32xf32>
    %26 = vector.extract_strided_slice %24 {offsets = [0, 32], sizes = [8, 32], strides = [1, 1]} : vector<8x128xf32> to vector<8x32xf32>
    %27 = vector.extract_strided_slice %24 {offsets = [0, 64], sizes = [8, 32], strides = [1, 1]} : vector<8x128xf32> to vector<8x32xf32>
    %28 = vector.extract_strided_slice %24 {offsets = [0, 96], sizes = [8, 32], strides = [1, 1]} : vector<8x128xf32> to vector<8x32xf32>
    %cst_19 = arith.constant 0.000000e+00 : f32
    %29 = vector.broadcast %cst_19 : f32 to vector<8x32xf32>
    %30 = arith.subf %29, %26 : vector<8x32xf32>
    %31 = math.exp %30 : vector<8x32xf32>
    %32 = arith.subf %28, %26 : vector<8x32xf32>
    %cst_20 = arith.constant 1.000000e+00 : f32
    %33 = vector.broadcast %cst_20 : f32 to vector<8x32xf32>
    %34 = arith.addf %33, %32 : vector<8x32xf32>
    %35 = arith.subf %25, %27 : vector<8x32xf32>
    %36 = arith.mulf %35, %35 : vector<8x32xf32>
    %37 = arith.mulf %36, %31 : vector<8x32xf32>
    %38 = arith.subf %34, %37 : vector<8x32xf32>
    %39 = math.exp %28 : vector<8x32xf32>
    %40 = arith.mulf %39, %31 : vector<8x32xf32>
    %41 = arith.subf %38, %40 : vector<8x32xf32>
    %cst_21 = arith.constant dense<0.000000e+00> : vector<8xf32>
    %42 = vector.multi_reduction <add>, %41, %cst_21 [1] : vector<8x32xf32> to vector<8xf32>
    %43 = vector.shape_cast %42 : vector<8xf32> to vector<8x1xf32>
    %cst_22 = arith.constant -5.000000e-01 : f32
    %44 = vector.broadcast %cst_22 : f32 to vector<8x1xf32>
    %45 = arith.mulf %44, %43 : vector<8x1xf32>
    %c0_23 = arith.constant 0 : index
    %c0_24 = arith.constant 0 : index
    %46 = vector.load %arg11[%c0_23, %c0_24] : memref<8x1xf32, #tpu.memory_space<vmem>>, vector<8x1xf32>
    tpu.vector_store %arg11[%c0_23, %c0_24], %45 {strides = array<i32>} : memref<8x1xf32, #tpu.memory_space<vmem>>, vector<8x1xf32>,
    %c0_25 = arith.constant 0 : index
    %c0_26 = arith.constant 0 : index
    %47 = vector.load %arg3[%c0_25, %c0_26] : memref<8x32xf32, #tpu.memory_space<vmem>>, vector<8x32xf32>
    %cst_27 = arith.constant 5.000000e-01 : f32
    %48 = vector.broadcast %cst_27 : f32 to vector<8x32xf32>
    %49 = arith.mulf %48, %28 : vector<8x32xf32>
    %50 = math.exp %49 : vector<8x32xf32>
    %51 = arith.mulf %47, %50 : vector<8x32xf32>
    %52 = arith.addf %51, %27 : vector<8x32xf32>
    %c0_28 = arith.constant 0 : index
    %c0_29 = arith.constant 0 : index
    %53 = vector.load %arg10[%c0_28, %c0_29] : memref<8x32xf32, #tpu.memory_space<vmem>>, vector<8x32xf32>
    tpu.vector_store %arg10[%c0_28, %c0_29], %52 {strides = array<i32>} : memref<8x32xf32, #tpu.memory_space<vmem>>, vector<8x32xf32>,
    return
  }
  func.func @transform_0(%arg0: i32) -> (i32, i32) {
    %c0_i32 = arith.constant 0 : i32
    %c0_i32_0 = arith.constant 0 : i32
    return %arg0, %c0_i32 : i32, i32
  }
  func.func @transform_1(%arg0: i32) -> (i32, i32) {
    %c0_i32 = arith.constant 0 : i32
    %c0_i32_0 = arith.constant 0 : i32
    return %arg0, %c0_i32 : i32, i32
  }
  func.func @transform_2(%arg0: i32) -> (i32, i32) {
    %c0_i32 = arith.constant 0 : i32
    %c0_i32_0 = arith.constant 0 : i32
    return %arg0, %c0_i32 : i32, i32
  }
  func.func @transform_3(%arg0: i32) -> (i32, i32) {
    %c0_i32 = arith.constant 0 : i32
    %c0_i32_0 = arith.constant 0 : i32
    %c0_i32_1 = arith.constant 0 : i32
    return %c0_i32, %c0_i32_0 : i32, i32
  }
  func.func @transform_4(%arg0: i32) -> (i32, i32) {
    %c0_i32 = arith.constant 0 : i32
    %c0_i32_0 = arith.constant 0 : i32
    %c0_i32_1 = arith.constant 0 : i32
    return %c0_i32, %c0_i32_0 : i32, i32
  }
  func.func @transform_5(%arg0: i32) -> (i32, i32) {
    %c0_i32 = arith.constant 0 : i32
    %c0_i32_0 = arith.constant 0 : i32
    %c0_i32_1 = arith.constant 0 : i32
    return %c0_i32, %c0_i32_0 : i32, i32
  }
  func.func @transform_6(%arg0: i32) -> (i32, i32) {
    %c0_i32 = arith.constant 0 : i32
    %c0_i32_0 = arith.constant 0 : i32
    %c0_i32_1 = arith.constant 0 : i32
    return %c0_i32, %c0_i32_0 : i32, i32
  }
  func.func @transform_7(%arg0: i32) -> (i32, i32) {
    %c0_i32 = arith.constant 0 : i32
    %c0_i32_0 = arith.constant 0 : i32
    %c0_i32_1 = arith.constant 0 : i32
    return %c0_i32, %c0_i32_0 : i32, i32
  }
  func.func @transform_8(%arg0: i32) -> (i32, i32) {
    %c0_i32 = arith.constant 0 : i32
    %c0_i32_0 = arith.constant 0 : i32
    %c0_i32_1 = arith.constant 0 : i32
    return %c0_i32, %c0_i32_0 : i32, i32
  }
  func.func @transform_9(%arg0: i32) -> (i32, i32) {
    %c0_i32 = arith.constant 0 : i32
    %c0_i32_0 = arith.constant 0 : i32
    return %arg0, %c0_i32 : i32, i32
  }
  func.func @transform_10(%arg0: i32) -> (i32, i32) {
    %c0_i32 = arith.constant 0 : i32
    %c0_i32_0 = arith.constant 0 : i32
    return %arg0, %c0_i32 : i32, i32
  }
}

</mosaic_0001>

<llo_original>
// kernel: latent_forward.1
$region0: #{latent_forward.1}
  #allocation0 [shape = 'u32[]', space=smem, size = 0x4, offset = 0x4, fixed_abs, tag = 'smem constant byte address 0x4 - core index']
  #allocation1 [shape = 'u32[144,128]{1,0:T(1,128)}', space=vmem, size = 0x12000, scoped, tag = 'internal scratch']
  %s0 = inlined_call_operand.vmem [shape: f32[16,32], index: 0, kind: input, shape index: {}]
  %s1 = inlined_call_operand.vmem [shape: f32[16,32], index: 1, kind: input, shape index: {}]
  %s2 = inlined_call_operand.vmem [shape: f32[16,32], index: 2, kind: input, shape index: {}]
  %s3 = inlined_call_operand.vmem [shape: bf16[64,256], index: 3, kind: input, shape index: {}]
  %s4 = inlined_call_operand.vmem [shape: f32[1,256], index: 4, kind: input, shape index: {}]
  %s5 = inlined_call_operand.vmem [shape: bf16[256,256], index: 5, kind: input, shape index: {}]
  %s6 = inlined_call_operand.vmem [shape: f32[1,256], index: 6, kind: input, shape index: {}]
  %s7 = inlined_call_operand.vmem [shape: bf16[256,128], index: 7, kind: input, shape index: {}]
  %s8 = inlined_call_operand.vmem [shape: f32[1,128], index: 8, kind: input, shape index: {}]
  %s9 = inlined_call_operand.hbm [shape: f32[16,32], index: 9, kind: output, shape index: {0}]
  %s10 = inlined_call_operand.vmem [shape: f32[16,1], index: 10, kind: output, shape index: {1}]
  %11 = xla_tuple %s9, %s10
  %s12 = sld [smem:[#allocation0]]
  $region77: #{latent_forward.1} parent=0
    _
  %s14 = ssub.s32 1, %s12
  %s15 = scalar_select 0, %s14, %s12
  $region1: #{latent_forward.1} parent=0
    #allocation2 [shape = 'u8[8192]{0}', space=vmem, size = 0x2000, scoped, tag = 'output window, operand 0']
    #allocation3 [shape = 's32[2]{0}', space=sflag, size = 0x8, scoped, tag = 'scoped memory for latent_forward.1']
    %16 = vsyncpa [#allocation3], 0
    %s17 = scalar_lea.sflag [#allocation3], 1
    %18 = vsyncpa %s17, 0
    loop: start=0, step=1, limit=4
    $region2: #{latent_forward.1} parent=1 // loop_pre_header
      _
    $region3: #{latent_forward.1} parent=1 // loop_header
      %s20 = sphi 0, %s24
      %p21 = scmp.ge.s32.totalorder %s20, 4
      %s30 = sphi 0, %s32
      %s33 = sphi 0, %s30
      %s34 = sphi 0, %s33
      %s50 = sphi 0, %s34
      %s56 = sphi 0, %s58
      %s59 = sphi 0, %s56
      %s60 = sphi 0, %s59
      %s76 = sphi 0, %s60
      %s82 = sphi 0, %s84
      %s85 = sphi 0, %s82
      %s86 = sphi 0, %s85
      %s102 = sphi 0, %s86
      %s106 = sphi 0, %s106
      %s108 = sphi 0, %s106
      %s109 = sphi 0, %s108
      %s123 = sphi 0, %s109
      %s127 = sphi 0, %s127
      %s129 = sphi 0, %s127
      %s130 = sphi 0, %s129
      %s144 = sphi 0, %s130
      %s148 = sphi 0, %s148
      %s150 = sphi 0, %s148
      %s151 = sphi 0, %s150
      %s165 = sphi 0, %s151
      %s169 = sphi 0, %s169
      %s171 = sphi 0, %s169
      %s172 = sphi 0, %s171
      %s186 = sphi 0, %s172
      %s190 = sphi 0, %s190
      %s192 = sphi 0, %s190
      %s193 = sphi 0, %s192
      %s207 = sphi 0, %s193
      %s211 = sphi 0, %s211
      %s213 = sphi 0, %s211
      %s214 = sphi 0, %s213
      %s228 = sphi 0, %s214
      %s234 = sphi 0, %s236
      %s237 = sphi 0, %s234
      %s238 = sphi 0, %s237
      %s254 = sphi 0, %s238
      %s260 = sphi 0, %s262
      %s263 = sphi 0, %s260
      %s264 = sphi 0, %s263
      %s280 = sphi 0, %s264
    $region4: #{latent_forward.1} parent=1 // loop_header_branch
      %23 = sbr.rel (%p21) target = $region8
    $region5: #{latent_forward.1} parent=1 // loop_body
      %s25 = ssub.s32 %s20, 1
      %s26 = ssub.s32 %s20, 2
      %s27 = sadd.s32 %s20, 1
      %s28 = ssub.s32 %s20, %s27
      %p29 = scmp.eq.s32.totalorder %s28, 0
      %s31 = sadd.s32 %s30, 1
      %s32 = scalar_select %p29, %s30, %s31
      %p35 = pneg %p29
      %p36 = scmp.eq.s32.totalorder %s20, 1
      %p37 = por %p35, %p36
      %p38 = scmp.ne.s32.totalorder %s30, %s33
      %p39 = scmp.eq.s32.totalorder %s20, 0
      %p40 = por %p38, %p39
      %p41 = scmp.ne.s32.totalorder %s30, %s33
      %p42 = scmp.eq.s32.totalorder %s25, 1
      %p43 = por %p41, %p42
      %p44 = scmp.ne.s32.totalorder %s33, %s34
      %p45 = scmp.eq.s32.totalorder %s25, 0
      %p46 = por %p44, %p45
      %p47 = scmp.ne.s32.totalorder %s33, %s34
      %p48 = scmp.eq.s32.totalorder %s26, 1
      %p49 = por %p47, %p48
      %p51 = scmp.ne.s32.totalorder %s34, %s50
      %p52 = scmp.eq.s32.totalorder %s26, 0
      %p53 = por %p51, %p52
      %s54 = ssub.s32 %s20, %s27
      %p55 = scmp.eq.s32.totalorder %s54, 0
      %s57 = sadd.s32 %s56, 1
      %s58 = scalar_select %p55, %s56, %s57
      %p61 = pneg %p55
      %p62 = scmp.eq.s32.totalorder %s20, 1
      %p63 = por %p61, %p62
      %p64 = scmp.ne.s32.totalorder %s56, %s59
      %p65 = scmp.eq.s32.totalorder %s20, 0
      %p66 = por %p64, %p65
      %p67 = scmp.ne.s32.totalorder %s56, %s59
      %p68 = scmp.eq.s32.totalorder %s25, 1
      %p69 = por %p67, %p68
      %p70 = scmp.ne.s32.totalorder %s59, %s60
      %p71 = scmp.eq.s32.totalorder %s25, 0
      %p72 = por %p70, %p71
      %p73 = scmp.ne.s32.totalorder %s59, %s60
      %p74 = scmp.eq.s32.totalorder %s26, 1
      %p75 = por %p73, %p74
      %p77 = scmp.ne.s32.totalorder %s60, %s76
      %p78 = scmp.eq.s32.totalorder %s26, 0
      %p79 = por %p77, %p78
      %s80 = ssub.s32 %s20, %s27
      %p81 = scmp.eq.s32.totalorder %s80, 0
      %s83 = sadd.s32 %s82, 1
      %s84 = scalar_select %p81, %s82, %s83
      %p87 = pneg %p81
      %p88 = scmp.eq.s32.totalorder %s20, 1
      %p89 = por %p87, %p88
      %p90 = scmp.ne.s32.totalorder %s82, %s85
      %p91 = scmp.eq.s32.totalorder %s20, 0
      %p92 = por %p90, %p91
      %p93 = scmp.ne.s32.totalorder %s82, %s85
      %p94 = scmp.eq.s32.totalorder %s25, 1
      %p95 = por %p93, %p94
      %p96 = scmp.ne.s32.totalorder %s85, %s86
      %p97 = scmp.eq.s32.totalorder %s25, 0
      %p98 = por %p96, %p97
      %p99 = scmp.ne.s32.totalorder %s85, %s86
      %p100 = scmp.eq.s32.totalorder %s26, 1
      %p101 = por %p99, %p100
      %p103 = scmp.ne.s32.totalorder %s86, %s102
      %p104 = scmp.eq.s32.totalorder %s26, 0
      %p105 = por %p103, %p104
      %s107 = sadd.s32 %s106, 1
      %p110 = scmp.eq.s32.totalorder %s20, 1
      %p111 = scmp.ne.s32.totalorder %s106, %s108
      %p112 = scmp.eq.s32.totalorder %s20, 0
      %p113 = por %p111, %p112
      %p114 = scmp.ne.s32.totalorder %s106, %s108
      %p115 = scmp.eq.s32.totalorder %s25, 1
      %p116 = por %p114, %p115
      %p117 = scmp.ne.s32.totalorder %s108, %s109
      %p118 = scmp.eq.s32.totalorder %s25, 0
      %p119 = por %p117, %p118
      %p120 = scmp.ne.s32.totalorder %s108, %s109
      %p121 = scmp.eq.s32.totalorder %s26, 1
      %p122 = por %p120, %p121
      %p124 = scmp.ne.s32.totalorder %s109, %s123
      %p125 = scmp.eq.s32.totalorder %s26, 0
      %p126 = por %p124, %p125
      %s128 = sadd.s32 %s127, 1
      %p131 = scmp.eq.s32.totalorder %s20, 1
      %p132 = scmp.ne.s32.totalorder %s127, %s129
      %p133 = scmp.eq.s32.totalorder %s20, 0
      %p134 = por %p132, %p133
      %p135 = scmp.ne.s32.totalorder %s127, %s129
      %p136 = scmp.eq.s32.totalorder %s25, 1
      %p137 = por %p135, %p136
      %p138 = scmp.ne.s32.totalorder %s129, %s130
      %p139 = scmp.eq.s32.totalorder %s25, 0
      %p140 = por %p138, %p139
      %p141 = scmp.ne.s32.totalorder %s129, %s130
      %p142 = scmp.eq.s32.totalorder %s26, 1
      %p143 = por %p141, %p142
      %p145 = scmp.ne.s32.totalorder %s130, %s144
      %p146 = scmp.eq.s32.totalorder %s26, 0
      %p147 = por %p145, %p146
      %s149 = sadd.s32 %s148, 1
      %p152 = scmp.eq.s32.totalorder %s20, 1
      %p153 = scmp.ne.s32.totalorder %s148, %s150
      %p154 = scmp.eq.s32.totalorder %s20, 0
      %p155 = por %p153, %p154
      %p156 = scmp.ne.s32.totalorder %s148, %s150
      %p157 = scmp.eq.s32.totalorder %s25, 1
      %p158 = por %p156, %p157
      %p159 = scmp.ne.s32.totalorder %s150, %s151
      %p160 = scmp.eq.s32.totalorder %s25, 0
      %p161 = por %p159, %p160
      %p162 = scmp.ne.s32.totalorder %s150, %s151
      %p163 = scmp.eq.s32.totalorder %s26, 1
      %p164 = por %p162, %p163
      %p166 = scmp.ne.s32.totalorder %s151, %s165
      %p167 = scmp.eq.s32.totalorder %s26, 0
      %p168 = por %p166, %p167
      %s170 = sadd.s32 %s169, 1
      %p173 = scmp.eq.s32.totalorder %s20, 1
      %p174 = scmp.ne.s32.totalorder %s169, %s171
      %p175 = scmp.eq.s32.totalorder %s20, 0
      %p176 = por %p174, %p175
      %p177 = scmp.ne.s32.totalorder %s169, %s171
      %p178 = scmp.eq.s32.totalorder %s25, 1
      %p179 = por %p177, %p178
      %p180 = scmp.ne.s32.totalorder %s171, %s172
      %p181 = scmp.eq.s32.totalorder %s25, 0
      %p182 = por %p180, %p181
      %p183 = scmp.ne.s32.totalorder %s171, %s172
      %p184 = scmp.eq.s32.totalorder %s26, 1
      %p185 = por %p183, %p184
      %p187 = scmp.ne.s32.totalorder %s172, %s186
      %p188 = scmp.eq.s32.totalorder %s26, 0
      %p189 = por %p187, %p188
      %s191 = sadd.s32 %s190, 1
      %p194 = scmp.eq.s32.totalorder %s20, 1
      %p195 = scmp.ne.s32.totalorder %s190, %s192
      %p196 = scmp.eq.s32.totalorder %s20, 0
      %p197 = por %p195, %p196
      %p198 = scmp.ne.s32.totalorder %s190, %s192
      %p199 = scmp.eq.s32.totalorder %s25, 1
      %p200 = por %p198, %p199
      %p201 = scmp.ne.s32.totalorder %s192, %s193
      %p202 = scmp.eq.s32.totalorder %s25, 0
      %p203 = por %p201, %p202
      %p204 = scmp.ne.s32.totalorder %s192, %s193
      %p205 = scmp.eq.s32.totalorder %s26, 1
      %p206 = por %p204, %p205
      %p208 = scmp.ne.s32.totalorder %s193, %s207
      %p209 = scmp.eq.s32.totalorder %s26, 0
      %p210 = por %p208, %p209
      %s212 = sadd.s32 %s211, 1
      %p215 = scmp.eq.s32.totalorder %s20, 1
      %p216 = scmp.ne.s32.totalorder %s211, %s213
      %p217 = scmp.eq.s32.totalorder %s20, 0
      %p218 = por %p216, %p217
      %p219 = scmp.ne.s32.totalorder %s211, %s213
      %p220 = scmp.eq.s32.totalorder %s25, 1
      %p221 = por %p219, %p220
      %p222 = scmp.ne.s32.totalorder %s213, %s214
      %p223 = scmp.eq.s32.totalorder %s25, 0
      %p224 = por %p222, %p223
      %p225 = scmp.ne.s32.totalorder %s213, %s214
      %p226 = scmp.eq.s32.totalorder %s26, 1
      %p227 = por %p225, %p226
      %p229 = scmp.ne.s32.totalorder %s214, %s228
      %p230 = scmp.eq.s32.totalorder %s26, 0
      %p231 = por %p229, %p230
      %s232 = ssub.s32 %s20, %s27
      %p233 = scmp.eq.s32.totalorder %s232, 0
      %s235 = sadd.s32 %s234, 1
      %s236 = scalar_select %p233, %s234, %s235
      %p239 = pneg %p233
      %p240 = scmp.eq.s32.totalorder %s20, 1
      %p241 = por %p239, %p240
      %p242 = scmp.ne.s32.totalorder %s234, %s237
      %p243 = scmp.eq.s32.totalorder %s20, 0
      %p244 = por %p242, %p243
      %p245 = scmp.ne.s32.totalorder %s234, %s237
      %p246 = scmp.eq.s32.totalorder %s25, 1
      %p247 = por %p245, %p246
      %p248 = scmp.ne.s32.totalorder %s237, %s238
      %p249 = scmp.eq.s32.totalorder %s25, 0
      %p250 = por %p248, %p249
      %p251 = scmp.ne.s32.totalorder %s237, %s238
      %p252 = scmp.eq.s32.totalorder %s26, 1
      %p253 = por %p251, %p252
      %p255 = scmp.ne.s32.totalorder %s238, %s254
      %p256 = scmp.eq.s32.totalorder %s26, 0
      %p257 = por %p255, %p256
      %s258 = ssub.s32 %s20, %s27
      %p259 = scmp.eq.s32.totalorder %s258, 0
      %s261 = sadd.s32 %s260, 1
      %s262 = scalar_select %p259, %s260, %s261
      %p265 = pneg %p259
      %p266 = scmp.eq.s32.totalorder %s20, 1
      %p267 = por %p265, %p266
      %p268 = scmp.ne.s32.totalorder %s260, %s263
      %p269 = scmp.eq.s32.totalorder %s20, 0
      %p270 = por %p268, %p269
      %p271 = scmp.ne.s32.totalorder %s260, %s263
      %p272 = scmp.eq.s32.totalorder %s25, 1
      %p273 = por %p271, %p272
      %p274 = scmp.ne.s32.totalorder %s263, %s264
      %p275 = scmp.eq.s32.totalorder %s25, 0
      %p276 = por %p274, %p275
      %p277 = scmp.ne.s32.totalorder %s263, %s264
      %p278 = scmp.eq.s32.totalorder %s26, 1
      %p279 = por %p277, %p278
      %p281 = scmp.ne.s32.totalorder %s264, %s280
      %p282 = scmp.eq.s32.totalorder %s26, 0
      %p283 = por %p281, %p282
      %p284 = scmp.le.s32.totalorder 1, %s20
      %p285 = scmp.lt.s32.totalorder %s20, 3
      %p286 = pnand %p284, %p285
      %p287 = pneg %p286
      // Predicated region
      $region9: #{latent_forward.1} parent=5 // pred_check
        _
      $region10: #{latent_forward.1} parent=5 // pred_check_branch
        %289 = sbr.rel (%p286) target = $region12
      $region11: #{latent_forward.1} parent=5 // pred_region
        %s290 = ssub.s32 %s20, 1
        // Predicated region
        $region13: #{latent_forward.1} parent=11 // pred_check
          %p291 = pneg %p119
        $region14: #{latent_forward.1} parent=11 // pred_check_branch
          %293 = sbr.rel (%p291) target = $region16
        $region15: #{latent_forward.1} parent=11 // pred_region
          _
        $region16: #{latent_forward.1} parent=11 // pred_fallthru
          _
        // Predicated region
        $region17: #{latent_forward.1} parent=11 // pred_check
          %p294 = pneg %p140
        $region18: #{latent_forward.1} parent=11 // pred_check_branch
          %296 = sbr.rel (%p294) target = $region20
        $region19: #{latent_forward.1} parent=11 // pred_region
          _
        $region20: #{latent_forward.1} parent=11 // pred_fallthru
          _
        // Predicated region
        $region21: #{latent_forward.1} parent=11 // pred_check
          %p297 = pneg %p161
        $region22: #{latent_forward.1} parent=11 // pred_check_branch
          %299 = sbr.rel (%p297) target = $region24
        $region23: #{latent_forward.1} parent=11 // pred_region
          _
        $region24: #{latent_forward.1} parent=11 // pred_fallthru
          _
        // Predicated region
        $region25: #{latent_forward.1} parent=11 // pred_check
          %p300 = pneg %p182
        $region26: #{latent_forward.1} parent=11 // pred_check_branch
          %302 = sbr.rel (%p300) target = $region28
        $region27: #{latent_forward.1} parent=11 // pred_region
          _
        $region28: #{latent_forward.1} parent=11 // pred_fallthru
          _
        // Predicated region
        $region29: #{latent_forward.1} parent=11 // pred_check
          %p303 = pneg %p203
        $region30: #{latent_forward.1} parent=11 // pred_check_branch
          %305 = sbr.rel (%p303) target = $region32
        $region31: #{latent_forward.1} parent=11 // pred_region
          _
        $region32: #{latent_forward.1} parent=11 // pred_fallthru
          _
        // Predicated region
        $region33: #{latent_forward.1} parent=11 // pred_check
          %p306 = pneg %p224
        $region34: #{latent_forward.1} parent=11 // pred_check_branch
          %308 = sbr.rel (%p306) target = $region36
        $region35: #{latent_forward.1} parent=11 // pred_region
          _
        $region36: #{latent_forward.1} parent=11 // pred_fallthru
          _
      $region12: #{latent_forward.1} parent=5 // pred_fallthru
        _
      %p309 = scmp.lt.s32.totalorder %s20, 2
      // Predicated region
      $region37: #{latent_forward.1} parent=5 // pred_check
        %p310 = pneg %p309
      $region38: #{latent_forward.1} parent=5 // pred_check_branch
        %312 = sbr.rel (%p310) target = $region40
      $region39: #{latent_forward.1} parent=5 // pred_region
        // Predicated region
        $region41: #{latent_forward.1} parent=39 // pred_check
          %p313 = pneg %p40
        $region42: #{latent_forward.1} parent=39 // pred_check_branch
          %315 = sbr.rel (%p313) target = $region44
        $region43: #{latent_forward.1} parent=39 // pred_region
          %p316 = scmp.lt.s32.totalorder %s20, 1
          %s317 = scalar_select %p316, %s20, 1
          %s318 = smul.addr %s317, 8
          %s319 = scalar_lea.vmem %s0, %s318
        $region44: #{latent_forward.1} parent=39 // pred_fallthru
          _
        // Predicated region
        $region45: #{latent_forward.1} parent=39 // pred_check
          %p320 = pneg %p66
        $region46: #{latent_forward.1} parent=39 // pred_check_branch
          %322 = sbr.rel (%p320) target = $region48
        $region47: #{latent_forward.1} parent=39 // pred_region
          %p323 = scmp.lt.s32.totalorder %s20, 1
          %s324 = scalar_select %p323, %s20, 1
          %s325 = smul.addr %s324, 8
          %s326 = scalar_lea.vmem %s1, %s325
        $region48: #{latent_forward.1} parent=39 // pred_fallthru
          _
        // Predicated region
        $region49: #{latent_forward.1} parent=39 // pred_check
          %p327 = pneg %p92
        $region50: #{latent_forward.1} parent=39 // pred_check_branch
          %329 = sbr.rel (%p327) target = $region52
        $region51: #{latent_forward.1} parent=39 // pred_region
          %p330 = scmp.lt.s32.totalorder %s20, 1
          %s331 = scalar_select %p330, %s20, 1
          %s332 = smul.addr %s331, 8
          %s333 = scalar_lea.vmem %s2, %s332
        $region52: #{latent_forward.1} parent=39 // pred_fallthru
          _
      $region40: #{latent_forward.1} parent=5 // pred_fallthru
        _
      %p334 = scmp.le.s32.totalorder 1, %s20
      %p335 = scmp.lt.s32.totalorder %s20, 3
      %p336 = pnand %p334, %p335
      %p337 = pneg %p336
      // Predicated region
      $region53: #{latent_forward.1} parent=5 // pred_check
        _
      $region54: #{latent_forward.1} parent=5 // pred_check_branch
        %339 = sbr.rel (%p336) target = $region56
      $region55: #{latent_forward.1} parent=5 // pred_region
        %s340 = ssub.s32 %s20, 1
        %p341 = scmp.lt.s32.totalorder %s25, 1
        %s342 = scalar_select %p341, %s25, 1
        %s343 = smul.addr %s342, 8
        %s344 = scalar_lea.vmem %s0, %s343
        %p345 = pneg %p46
        %p346 = pneg %p43
        %p347 = scmp.lt.s32.totalorder %s25, 1
        %s348 = scalar_select %p347, %s25, 1
        %s349 = smul.addr %s348, 8
        %s350 = scalar_lea.vmem %s1, %s349
        %p351 = pneg %p72
        %p352 = pneg %p69
        %p353 = scmp.lt.s32.totalorder %s25, 1
        %s354 = scalar_select %p353, %s25, 1
        %s355 = smul.addr %s354, 8
        %s356 = scalar_lea.vmem %s2, %s355
        %p357 = pneg %p98
        %p358 = pneg %p95
        %p359 = pneg %p119
        %p360 = pneg %p116
        %p361 = pneg %p140
        %p362 = pneg %p137
        %p363 = pneg %p161
        %p364 = pneg %p158
        %p365 = pneg %p182
        %p366 = pneg %p179
        %p367 = pneg %p203
        %p368 = pneg %p200
        %p369 = pneg %p224
        %p370 = pneg %p221
        %p371 = pneg %p250
        %p372 = pneg %p247
        %s373 = sand.u32 %s237, 1
        %s374 = scalar_lea.sflag [#allocation3], %s373
        %s375 = sand.u32 %s237, 1
        %s376 = smul.addr %s375, 8
        %s377 = scalar_lea.vmem [#allocation2], %s376
        %p378 = pneg %p276
        %p379 = pneg %p273
        %p380 = scmp.lt.s32.totalorder %s25, 1
        %s381 = scalar_select %p380, %s25, 1
        %s382 = smul.addr %s381, 8
        %s383 = scalar_lea.vmem %s10, %s382
        %p384 = scmp.lt.s32.totalorder %s25, 1
        %s385 = scalar_select %p384, %s25, 1
        %s386 = smul.addr %s385, 8
        %s387 = scalar_lea.vmem %s0, %s386
        %p388 = scmp.lt.s32.totalorder %s25, 1
        %s389 = scalar_select %p388, %s25, 1
        %s390 = smul.addr %s389, 8
        %s391 = scalar_lea.vmem %s1, %s390
        %p392 = scmp.lt.s32.totalorder %s25, 1
        %s393 = scalar_select %p392, %s25, 1
        %s394 = smul.addr %s393, 8
        %s395 = scalar_lea.vmem %s2, %s394
        %p396 = scmp.lt.s32.totalorder %s25, 1
        %s397 = scalar_select %p396, %s25, 1
        %s398 = smul.addr %s397, 8
        %s399 = scalar_lea.vmem %s10, %s398
        %v401 = vld [vmem:[%s387] sm:$0xff]
        %v402 = vld [vmem:[%s391] sm:$0xff]
        %404 = vrot.lane.b32.xlu0 %v401, 32
        %v405 = vpop.permute.xlu0 %404
        %vm407 = vcmask 261120
        %v408 = vsel %vm407, %v402, %v405
        %v409 = vpack.c.bf16 %v408, %v408
        %v410 = vld [vmem:[%s3] sm:$0xff]
        %v411 = vld [vmem:[%s3 + $0x8] sm:$0xff]
        %v412 = vld [vmem:[%s3 + $0x10] sm:$0xff]
        %v413 = vld [vmem:[%s3 + $0x18] sm:$0xff]
        %v414 = vld [vmem:[%s3 + $0x20] sm:$0xff]
        %v415 = vld [vmem:[%s3 + $0x28] sm:$0xff]
        %v416 = vld [vmem:[%s3 + $0x30] sm:$0xff]
        %v417 = vld [vmem:[%s3 + $0x38] sm:$0xff]
        %v418 = vld [vmem:[%s4] sm:$0x3]
        %v420 = vlaneseq
        %v421 = vshrl.u32 %v420, 7
        %v422 = vsub.s32 0, %v421
        %v423 = vrot.slane %v418, %v422
        %v424 = vlaneseq
        %v425 = vshrl.u32 %v424, 7
        %v426 = vsub.s32 1, %v425
        %v427 = vrot.slane %v418, %v426
        %v438 = vunpack.c.l.b16 %v410
        %v439 = vunpack.c.h.b16 %v410
        %v440 = vunpack.c.l.b16 %v411
        %v441 = vunpack.c.h.b16 %v411
        %v442 = vunpack.c.l.b16 %v412
        %v443 = vunpack.c.h.b16 %v412
        %v444 = vunpack.c.l.b16 %v413
        %v445 = vunpack.c.h.b16 %v413
        %v446 = vunpack.c.l.b16 %v414
        %v447 = vunpack.c.h.b16 %v414
        %v448 = vunpack.c.l.b16 %v415
        %v449 = vunpack.c.h.b16 %v415
        %v450 = vunpack.c.l.b16 %v416
        %v451 = vunpack.c.h.b16 %v416
        %v452 = vunpack.c.l.b16 %v417
        %v453 = vunpack.c.h.b16 %v417
        %v454 = vpack.c.b16 %v440, %v438
        %v455 = vpack.c.b16 %v441, %v439
        %v456 = vpack.c.b16 %v444, %v442
        %v457 = vpack.c.b16 %v445, %v443
        %v458 = vpack.c.b16 %v448, %v446
        %v459 = vpack.c.b16 %v449, %v447
        %v460 = vpack.c.b16 %v452, %v450
        %v461 = vpack.c.b16 %v453, %v451
        %vm470 = vcmask 523264
        %v472 = vsel %vm470, %v409, 0
        %474 = vmatprep.subr.bf16.mxu0 0
        %475 = vmatpush1.bf16.msra.mxu0 0
        %476 = vmatprep.subr.bf16.mxu0 0
        %477 = vmatpush1.bf16.msra.mxu0 0
        %478 = vmatprep.subr.bf16.mxu0 0
        %479 = vmatpush1.bf16.msra.mxu0 0
        %480 = vmatprep.subr.bf16.mxu0 0
        %481 = vmatpush1.bf16.msra.mxu0 0
        %482 = vmatprep.subr.bf16.mxu0 %v461
        %483 = vmatpush1.bf16.msra.mxu0 %v460
        %484 = vmatprep.subr.bf16.mxu0 %v459
        %485 = vmatpush1.bf16.msra.mxu0 %v458
        %486 = vmatprep.subr.bf16.mxu0 %v457
        %487 = vmatpush1.bf16.msra.mxu0 %v456
        %488 = vmatprep.subr.bf16.mxu0 %v455
        %489 = vmatpush1.bf16.msra.mxu0 %v454
        %490 = vmatprep.subr.bf16.mxu0 0
        %491 = vmatpush2.bf16.msra.mxu0 0
        %492 = vmatprep.subr.bf16.mxu0 0
        %493 = vmatpush2.bf16.msra.mxu0 0
        %494 = vmatprep.subr.bf16.mxu0 0
        %495 = vmatpush2.bf16.msra.mxu0 0
        %496 = vmatprep.subr.bf16.mxu0 0
        %497 = vmatpush2.bf16.msra.mxu0 0
        %498 = vmatprep.subr.bf16.mxu0 0
        %499 = vmatpush2.bf16.msra.mxu0 0
        %500 = vmatprep.subr.bf16.mxu0 0
        %501 = vmatpush2.bf16.msra.mxu0 0
        %502 = vmatprep.subr.bf16.mxu0 0
        %503 = vmatpush2.bf16.msra.mxu0 0
        %504 = vmatprep.subr.bf16.mxu0 0
        %505 = vmatpush2.bf16.msra.mxu0 0
        %506 = vmatprep.mubr.bf16.mxu0 0
        %507 = vmatmul.mubr.bf16.gmra.mxu0 %v472
        %v508 = vpop.f32.mrf.mxu0
        %v509 = vadd.f32 %v423, %v508
        %v510 = vpop.f32.mrf.mxu0
        %v511 = vadd.f32 %v427, %v510
        %v512 = vpop.f32.mrf.mxu0
        %v513 = vpop.f32.mrf.mxu0
        %514 = vdwg.mxu0
        %v515 = vmax.f32 %v509, 0.0
        %v516 = vmax.f32 %v511, 0.0
        %v517 = vpack.c.bf16 %v515, %v515
        %v518 = vpack.c.bf16 %v516, %v516
        %v519 = vld [vmem:[%s5] sm:$0xff]
        %v520 = vld [vmem:[%s5 + $0x8] sm:$0xff]
        %v521 = vld [vmem:[%s5 + $0x10] sm:$0xff]
        %v522 = vld [vmem:[%s5 + $0x18] sm:$0xff]
        %v523 = vld [vmem:[%s5 + $0x20] sm:$0xff]
        %v524 = vld [vmem:[%s5 + $0x28] sm:$0xff]
        %v525 = vld [vmem:[%s5 + $0x30] sm:$0xff]
        %v526 = vld [vmem:[%s5 + $0x38] sm:$0xff]
        %v527 = vld [vmem:[%s5 + $0x40] sm:$0xff]
        %v528 = vld [vmem:[%s5 + $0x48] sm:$0xff]
        %v529 = vld [vmem:[%s5 + $0x50] sm:$0xff]
        %v530 = vld [vmem:[%s5 + $0x58] sm:$0xff]
        %v531 = vld [vmem:[%s5 + $0x60] sm:$0xff]
        %v532 = vld [vmem:[%s5 + $0x68] sm:$0xff]
        %v533 = vld [vmem:[%s5 + $0x70] sm:$0xff]
        %v534 = vld [vmem:[%s5 + $0x78] sm:$0xff]
        %v535 = vld [vmem:[%s5 + $0x80] sm:$0xff]
        %v536 = vld [vmem:[%s5 + $0x88] sm:$0xff]
        %v537 = vld [vmem:[%s5 + $0x90] sm:$0xff]
        %v538 = vld [vmem:[%s5 + $0x98] sm:$0xff]
        %v539 = vld [vmem:[%s5 + $0xa0] sm:$0xff]
        %v540 = vld [vmem:[%s5 + $0xa8] sm:$0xff]
        %v541 = vld [vmem:[%s5 + $0xb0] sm:$0xff]
        %v542 = vld [vmem:[%s5 + $0xb8] sm:$0xff]
        %v543 = vld [vmem:[%s5 + $0xc0] sm:$0xff]
        %v544 = vld [vmem:[%s5 + $0xc8] sm:$0xff]
        %v545 = vld [vmem:[%s5 + $0xd0] sm:$0xff]
        %v546 = vld [vmem:[%s5 + $0xd8] sm:$0xff]
        %v547 = vld [vmem:[%s5 + $0xe0] sm:$0xff]
        %v548 = vld [vmem:[%s5 + $0xe8] sm:$0xff]
        %v549 = vld [vmem:[%s5 + $0xf0] sm:$0xff]
        %v550 = vld [vmem:[%s5 + $0xf8] sm:$0xff]
        %v551 = vld [vmem:[%s6] sm:$0x3]
        %v553 = vlaneseq
        %v554 = vshrl.u32 %v553, 7
        %v555 = vsub.s32 0, %v554
        %v556 = vrot.slane %v551, %v555
        %v557 = vlaneseq
        %v558 = vshrl.u32 %v557, 7
        %v559 = vsub.s32 1, %v558
        %v560 = vrot.slane %v551, %v559
        %v595 = vunpack.c.l.b16 %v519
        %v596 = vunpack.c.h.b16 %v519
        %v597 = vunpack.c.l.b16 %v520
        %v598 = vunpack.c.h.b16 %v520
        %v599 = vunpack.c.l.b16 %v521
        %v600 = vunpack.c.h.b16 %v521
        %v601 = vunpack.c.l.b16 %v522
        %v602 = vunpack.c.h.b16 %v522
        %v603 = vunpack.c.l.b16 %v523
        %v604 = vunpack.c.h.b16 %v523
        %v605 = vunpack.c.l.b16 %v524
        %v606 = vunpack.c.h.b16 %v524
        %v607 = vunpack.c.l.b16 %v525
        %v608 = vunpack.c.h.b16 %v525
        %v609 = vunpack.c.l.b16 %v526
        %v610 = vunpack.c.h.b16 %v526
        %v611 = vunpack.c.l.b16 %v527
        %v612 = vunpack.c.h.b16 %v527
        %v613 = vunpack.c.l.b16 %v528
        %v614 = vunpack.c.h.b16 %v528
        %v615 = vunpack.c.l.b16 %v529
        %v616 = vunpack.c.h.b16 %v529
        %v617 = vunpack.c.l.b16 %v530
        %v618 = vunpack.c.h.b16 %v530
        %v619 = vunpack.c.l.b16 %v531
        %v620 = vunpack.c.h.b16 %v531
        %v621 = vunpack.c.l.b16 %v532
        %v622 = vunpack.c.h.b16 %v532
        %v623 = vunpack.c.l.b16 %v533
        %v624 = vunpack.c.h.b16 %v533
        %v625 = vunpack.c.l.b16 %v534
        %v626 = vunpack.c.h.b16 %v534
        %v627 = vunpack.c.l.b16 %v535
        %v628 = vunpack.c.h.b16 %v535
        %v629 = vunpack.c.l.b16 %v536
        %v630 = vunpack.c.h.b16 %v536
        %v631 = vunpack.c.l.b16 %v537
        %v632 = vunpack.c.h.b16 %v537
        %v633 = vunpack.c.l.b16 %v538
        %v634 = vunpack.c.h.b16 %v538
        %v635 = vunpack.c.l.b16 %v539
        %v636 = vunpack.c.h.b16 %v539
        %v637 = vunpack.c.l.b16 %v540
        %v638 = vunpack.c.h.b16 %v540
        %v639 = vunpack.c.l.b16 %v541
        %v640 = vunpack.c.h.b16 %v541
        %v641 = vunpack.c.l.b16 %v542
        %v642 = vunpack.c.h.b16 %v542
        %v643 = vunpack.c.l.b16 %v543
        %v644 = vunpack.c.h.b16 %v543
        %v645 = vunpack.c.l.b16 %v544
        %v646 = vunpack.c.h.b16 %v544
        %v647 = vunpack.c.l.b16 %v545
        %v648 = vunpack.c.h.b16 %v545
        %v649 = vunpack.c.l.b16 %v546
        %v650 = vunpack.c.h.b16 %v546
        %v651 = vunpack.c.l.b16 %v547
        %v652 = vunpack.c.h.b16 %v547
        %v653 = vunpack.c.l.b16 %v548
        %v654 = vunpack.c.h.b16 %v548
        %v655 = vunpack.c.l.b16 %v549
        %v656 = vunpack.c.h.b16 %v549
        %v657 = vunpack.c.l.b16 %v550
        %v658 = vunpack.c.h.b16 %v550
        %v659 = vpack.c.b16 %v597, %v595
        %v660 = vpack.c.b16 %v598, %v596
        %v661 = vpack.c.b16 %v601, %v599
        %v662 = vpack.c.b16 %v602, %v600
        %v663 = vpack.c.b16 %v605, %v603
        %v664 = vpack.c.b16 %v606, %v604
        %v665 = vpack.c.b16 %v609, %v607
        %v666 = vpack.c.b16 %v610, %v608
        %v667 = vpack.c.b16 %v613, %v611
        %v668 = vpack.c.b16 %v614, %v612
        %v669 = vpack.c.b16 %v617, %v615
        %v670 = vpack.c.b16 %v618, %v616
        %v671 = vpack.c.b16 %v621, %v619
        %v672 = vpack.c.b16 %v622, %v620
        %v673 = vpack.c.b16 %v625, %v623
        %v674 = vpack.c.b16 %v626, %v624
        %v675 = vpack.c.b16 %v629, %v627
        %v676 = vpack.c.b16 %v630, %v628
        %v677 = vpack.c.b16 %v633, %v631
        %v678 = vpack.c.b16 %v634, %v632
        %v679 = vpack.c.b16 %v637, %v635
        %v680 = vpack.c.b16 %v638, %v636
        %v681 = vpack.c.b16 %v641, %v639
        %v682 = vpack.c.b16 %v642, %v640
        %v683 = vpack.c.b16 %v645, %v643
        %v684 = vpack.c.b16 %v646, %v644
        %v685 = vpack.c.b16 %v649, %v647
        %v686 = vpack.c.b16 %v650, %v648
        %v687 = vpack.c.b16 %v653, %v651
        %v688 = vpack.c.b16 %v654, %v652
        %v689 = vpack.c.b16 %v657, %v655
        %v690 = vpack.c.b16 %v658, %v656
        %723 = vmatprep.subr.bf16.mxu0 %v674
        %724 = vmatpush1.bf16.msra.mxu0 %v673
        %725 = vmatprep.subr.bf16.mxu0 %v672
        %726 = vmatpush1.bf16.msra.mxu0 %v671
        %727 = vmatprep.subr.bf16.mxu0 %v670
        %728 = vmatpush1.bf16.msra.mxu0 %v669
        %729 = vmatprep.subr.bf16.mxu0 %v668
        %730 = vmatpush1.bf16.msra.mxu0 %v667
        %731 = vmatprep.subr.bf16.mxu0 %v666
        %732 = vmatpush1.bf16.msra.mxu0 %v665
        %733 = vmatprep.subr.bf16.mxu0 %v664
        %734 = vmatpush1.bf16.msra.mxu0 %v663
        %735 = vmatprep.subr.bf16.mxu0 %v662
        %736 = vmatpush1.bf16.msra.mxu0 %v661
        %737 = vmatprep.subr.bf16.mxu0 %v660
        %738 = vmatpush1.bf16.msra.mxu0 %v659
        %739 = vmatprep.subr.bf16.mxu0 %v690
        %740 = vmatpush2.bf16.msra.mxu0 %v689
        %741 = vmatprep.subr.bf16.mxu0 %v688
        %742 = vmatpush2.bf16.msra.mxu0 %v687
        %743 = vmatprep.subr.bf16.mxu0 %v686
        %744 = vmatpush2.bf16.msra.mxu0 %v685
        %745 = vmatprep.subr.bf16.mxu0 %v684
        %746 = vmatpush2.bf16.msra.mxu0 %v683
        %747 = vmatprep.subr.bf16.mxu0 %v682
        %748 = vmatpush2.bf16.msra.mxu0 %v681
        %749 = vmatprep.subr.bf16.mxu0 %v680
        %750 = vmatpush2.bf16.msra.mxu0 %v679
        %751 = vmatprep.subr.bf16.mxu0 %v678
        %752 = vmatpush2.bf16.msra.mxu0 %v677
        %753 = vmatprep.subr.bf16.mxu0 %v676
        %754 = vmatpush2.bf16.msra.mxu0 %v675
        %755 = vmatprep.mubr.bf16.mxu0 %v518
        %756 = vmatmul.mubr.bf16.gmra.mxu0 %v517
        %v757 = vpop.f32.mrf.mxu0
        %v758 = vadd.f32 %v556, %v757
        %v759 = vpop.f32.mrf.mxu0
        %v760 = vadd.f32 %v560, %v759
        %v761 = vpop.f32.mrf.mxu0
        %v762 = vpop.f32.mrf.mxu0
        %763 = vdwg.mxu0
        %v764 = vmax.f32 %v758, 0.0
        %v765 = vmax.f32 %v760, 0.0
        %v766 = vpack.c.bf16 %v764, %v764
        %v767 = vpack.c.bf16 %v765, %v765
        %v768 = vld [vmem:[%s7] sm:$0xf]
        %v769 = vld [vmem:[%s7 + $0x4] sm:$0xf]
        %v770 = vld [vmem:[%s7 + $0x8] sm:$0xf]
        %v771 = vld [vmem:[%s7 + $0xc] sm:$0xf]
        %v772 = vld [vmem:[%s7 + $0x10] sm:$0xf]
        %v773 = vld [vmem:[%s7 + $0x14] sm:$0xf]
        %v774 = vld [vmem:[%s7 + $0x18] sm:$0xf]
        %v775 = vld [vmem:[%s7 + $0x1c] sm:$0xf]
        %v776 = vld [vmem:[%s7 + $0x20] sm:$0xf]
        %v777 = vld [vmem:[%s7 + $0x24] sm:$0xf]
        %v778 = vld [vmem:[%s7 + $0x28] sm:$0xf]
        %v779 = vld [vmem:[%s7 + $0x2c] sm:$0xf]
        %v780 = vld [vmem:[%s7 + $0x30] sm:$0xf]
        %v781 = vld [vmem:[%s7 + $0x34] sm:$0xf]
        %v782 = vld [vmem:[%s7 + $0x38] sm:$0xf]
        %v783 = vld [vmem:[%s7 + $0x3c] sm:$0xf]
        %v784 = vld [vmem:[%s7 + $0x40] sm:$0xf]
        %v785 = vld [vmem:[%s7 + $0x44] sm:$0xf]
        %v786 = vld [vmem:[%s7 + $0x48] sm:$0xf]
        %v787 = vld [vmem:[%s7 + $0x4c] sm:$0xf]
        %v788 = vld [vmem:[%s7 + $0x50] sm:$0xf]
        %v789 = vld [vmem:[%s7 + $0x54] sm:$0xf]
        %v790 = vld [vmem:[%s7 + $0x58] sm:$0xf]
        %v791 = vld [vmem:[%s7 + $0x5c] sm:$0xf]
        %v792 = vld [vmem:[%s7 + $0x60] sm:$0xf]
        %v793 = vld [vmem:[%s7 + $0x64] sm:$0xf]
        %v794 = vld [vmem:[%s7 + $0x68] sm:$0xf]
        %v795 = vld [vmem:[%s7 + $0x6c] sm:$0xf]
        %v796 = vld [vmem:[%s7 + $0x70] sm:$0xf]
        %v797 = vld [vmem:[%s7 + $0x74] sm:$0xf]
        %v798 = vld [vmem:[%s7 + $0x78] sm:$0xf]
        %v799 = vld [vmem:[%s7 + $0x7c] sm:$0xf]
        %v800 = vld [vmem:[%s8] sm:$0x1]
        %v802 = vlaneseq
        %v803 = vshrl.u32 %v802, 7
        %v804 = vsub.s32 0, %v803
        %v805 = vrot.slane %v800, %v804
        %v839 = vunpack.c.l.b16 %v768
        %v840 = vunpack.c.l.b16 %v769
        %v841 = vunpack.c.l.b16 %v770
        %v842 = vunpack.c.l.b16 %v771
        %v843 = vunpack.c.l.b16 %v772
        %v844 = vunpack.c.l.b16 %v773
        %v845 = vunpack.c.l.b16 %v774
        %v846 = vunpack.c.l.b16 %v775
        %v847 = vunpack.c.l.b16 %v776
        %v848 = vunpack.c.l.b16 %v777
        %v849 = vunpack.c.l.b16 %v778
        %v850 = vunpack.c.l.b16 %v779
        %v851 = vunpack.c.l.b16 %v780
        %v852 = vunpack.c.l.b16 %v781
        %v853 = vunpack.c.l.b16 %v782
        %v854 = vunpack.c.l.b16 %v783
        %v855 = vunpack.c.l.b16 %v784
        %v856 = vunpack.c.l.b16 %v785
        %v857 = vunpack.c.l.b16 %v786
        %v858 = vunpack.c.l.b16 %v787
        %v859 = vunpack.c.l.b16 %v788
        %v860 = vunpack.c.l.b16 %v789
        %v861 = vunpack.c.l.b16 %v790
        %v862 = vunpack.c.l.b16 %v791
        %v863 = vunpack.c.l.b16 %v792
        %v864 = vunpack.c.l.b16 %v793
        %v865 = vunpack.c.l.b16 %v794
        %v866 = vunpack.c.l.b16 %v795
        %v867 = vunpack.c.l.b16 %v796
        %v868 = vunpack.c.l.b16 %v797
        %v869 = vunpack.c.l.b16 %v798
        %v870 = vunpack.c.l.b16 %v799
        %v871 = vpack.c.b16 %v840, %v839
        %v872 = vpack.c.b16 %v842, %v841
        %v873 = vpack.c.b16 %v844, %v843
        %v874 = vpack.c.b16 %v846, %v845
        %v875 = vpack.c.b16 %v848, %v847
        %v876 = vpack.c.b16 %v850, %v849
        %v877 = vpack.c.b16 %v852, %v851
        %v878 = vpack.c.b16 %v854, %v853
        %v879 = vpack.c.b16 %v856, %v855
        %v880 = vpack.c.b16 %v858, %v857
        %v881 = vpack.c.b16 %v860, %v859
        %v882 = vpack.c.b16 %v862, %v861
        %v883 = vpack.c.b16 %v864, %v863
        %v884 = vpack.c.b16 %v866, %v865
        %v885 = vpack.c.b16 %v868, %v867
        %v886 = vpack.c.b16 %v870, %v869
        %903 = vmatprep.subr.bf16.mxu0 0
        %904 = vmatpush1.bf16.msra.mxu0 %v878
        %905 = vmatprep.subr.bf16.mxu0 0
        %906 = vmatpush1.bf16.msra.mxu0 %v877
        %907 = vmatprep.subr.bf16.mxu0 0
        %908 = vmatpush1.bf16.msra.mxu0 %v876
        %909 = vmatprep.subr.bf16.mxu0 0
        %910 = vmatpush1.bf16.msra.mxu0 %v875
        %911 = vmatprep.subr.bf16.mxu0 0
        %912 = vmatpush1.bf16.msra.mxu0 %v874
        %913 = vmatprep.subr.bf16.mxu0 0
        %914 = vmatpush1.bf16.msra.mxu0 %v873
        %915 = vmatprep.subr.bf16.mxu0 0
        %916 = vmatpush1.bf16.msra.mxu0 %v872
        %917 = vmatprep.subr.bf16.mxu0 0
        %918 = vmatpush1.bf16.msra.mxu0 %v871
        %919 = vmatprep.subr.bf16.mxu0 0
        %920 = vmatpush2.bf16.msra.mxu0 %v886
        %921 = vmatprep.subr.bf16.mxu0 0
        %922 = vmatpush2.bf16.msra.mxu0 %v885
        %923 = vmatprep.subr.bf16.mxu0 0
        %924 = vmatpush2.bf16.msra.mxu0 %v884
        %925 = vmatprep.subr.bf16.mxu0 0
        %926 = vmatpush2.bf16.msra.mxu0 %v883
        %927 = vmatprep.subr.bf16.mxu0 0
        %928 = vmatpush2.bf16.msra.mxu0 %v882
        %929 = vmatprep.subr.bf16.mxu0 0
        %930 = vmatpush2.bf16.msra.mxu0 %v881
        %931 = vmatprep.subr.bf16.mxu0 0
        %932 = vmatpush2.bf16.msra.mxu0 %v880
        %933 = vmatprep.subr.bf16.mxu0 0
        %934 = vmatpush2.bf16.msra.mxu0 %v879
        %935 = vmatprep.mubr.bf16.mxu0 %v767
        %936 = vmatmul.mubr.bf16.gmra.mxu0 %v766
        %v937 = vpop.f32.mrf.mxu0
        %v938 = vadd.f32 %v805, %v937
        %v939 = vpop.f32.mrf.mxu0
        %v940 = vpop.f32.mrf.mxu0
        %v941 = vpop.f32.mrf.mxu0
        %942 = vdwg.mxu0
        %v943 = vsub.f32 0.0, %v938
        %v944 = vmul.f32 %v943, 1.442695
        %v945 = vpow.pop %v944
        %947 = vrot.lane.b32.xlu0 %v938, 64
        %v948 = vpop.permute.xlu0 %947
        %v950 = vsub.f32 %v938, %v948
        %v951 = vadd.f32 %v950, 1.0
        %v952 = vmul.f32 %v950, %v950
        %954 = vrot.lane.b32.xlu0 %v945, 96
        %v955 = vpop.permute.xlu0 %954
        %v957 = vmul.f32 %v952, %v955
        %959 = vrot.lane.b32.xlu0 %v957, 96
        %v960 = vpop.permute.xlu0 %959
        %v962 = vsub.f32 %v951, %v960
        %v963 = vmul.f32 %v938, 1.442695
        %v964 = vpow.pop %v963
        %965 = vrot.lane.b32.xlu0 %v945, 64
        %v966 = vpop.permute.xlu0 %965
        %v968 = vmul.f32 %v964, %v966
        %v969 = vsub.f32 %v962, %v968
        %971 = vrot.lane.b32.xlu0 %v969, 32
        %v972 = vpop.permute.xlu0 %971
        %v974 = vsel %vm407, %v972, 0.0
        %975 = vadd.xlane.f32.xlu0 %v974
        %v976 = vpop.xlane.xlu0 %975
        %v977 = vmul.f32 %v976, -0.5
        %vm978 = vcmask 7168
        %979 = vst.msk [vmem:[%s399] sm:$0xff] %vm978, %v977
        %v980 = vld [vmem:[%s395] sm:$0xff]
        %v981 = vmul.f32 %v938, 0.5
        %v982 = vmul.f32 %v981, 1.442695
        %v983 = vpow.pop %v982
        %985 = vrot.lane.b32.xlu0 %v983, 32
        %v986 = vpop.permute.xlu0 %985
        %v988 = vmul.f32 %v980, %v986
        %v989 = vadd.f32 %v988, %v948
        %990 = vst.msk [vmem:[%s377] sm:$0xff] %vm407, %v989
        %s991 = sand.u32 %s237, 1
        %s992 = scalar_lea.sflag [#allocation3], %s991
        %s993 = sand.u32 %s237, 1
        %s994 = smul.addr %s993, 8
        %s995 = scalar_lea.vmem [#allocation2], %s994
        %p996 = scmp.lt.s32.totalorder %s25, 1
        %s997 = scalar_select %p996, %s25, 1
        %s998 = smul.addr %s997, 8
        %s999 = scalar_lea.vmem %s10, %s998
        // Predicated region
        $region57: #{latent_forward.1} parent=55 // pred_check
          %p1000 = pneg %p247
        $region58: #{latent_forward.1} parent=55 // pred_check_branch
          %1002 = sbr.rel (%p1000) target = $region60
        $region59: #{latent_forward.1} parent=55 // pred_region
          %s1004 = ssub.s32 128, 128
          %1005 = vsyncadd %s992, %s1004
          %s1006 = smul.addr %s25, 128
          %s1007 = scalar_lea.hbm %s9, %s1006
          %s1009 = sshll.u32 %s995, 4
          %s1010 = int_to_ptr.vmem [resolvable:$true] %s1009
          %1012 = dma.vmem_to_hbm [thread:$0]  %s1010, 128, %s1007, %s992
        $region60: #{latent_forward.1} parent=55 // pred_fallthru
          _
        // Predicated region
        $region61: #{latent_forward.1} parent=55 // pred_check
          %p1013 = pneg %p273
        $region62: #{latent_forward.1} parent=55 // pred_check_branch
          %1015 = sbr.rel (%p1013) target = $region64
        $region63: #{latent_forward.1} parent=55 // pred_region
          _
        $region64: #{latent_forward.1} parent=55 // pred_fallthru
          _
      $region56: #{latent_forward.1} parent=5 // pred_fallthru
        _
      %p1016 = scmp.le.s32.totalorder 2, %s20
      // Predicated region
      $region65: #{latent_forward.1} parent=5 // pred_check
        %p1017 = pneg %p1016
      $region66: #{latent_forward.1} parent=5 // pred_check_branch
        %1019 = sbr.rel (%p1017) target = $region68
      $region67: #{latent_forward.1} parent=5 // pred_region
        %s1020 = ssub.s32 %s20, 2
        // Predicated region
        $region69: #{latent_forward.1} parent=67 // pred_check
          %p1021 = pneg %p253
        $region70: #{latent_forward.1} parent=67 // pred_check_branch
          %1023 = sbr.rel (%p1021) target = $region72
        $region71: #{latent_forward.1} parent=67 // pred_region
          %s1024 = sand.u32 %s238, 1
          %s1025 = scalar_lea.sflag [#allocation3], %s1024
          %s1026 = sand.u32 %s238, 1
          %s1027 = smul.addr %s1026, 8
          %s1028 = scalar_lea.vmem [#allocation2], %s1027
          %1029 = dma.done %s1025, 128
        $region72: #{latent_forward.1} parent=67 // pred_fallthru
          _
        // Predicated region
        $region73: #{latent_forward.1} parent=67 // pred_check
          %p1030 = pneg %p279
        $region74: #{latent_forward.1} parent=67 // pred_check_branch
          %1032 = sbr.rel (%p1030) target = $region76
        $region75: #{latent_forward.1} parent=67 // pred_region
          %p1033 = scmp.lt.s32.totalorder %s26, 1
          %s1034 = scalar_select %p1033, %s26, 1
          %s1035 = smul.addr %s1034, 8
          %s1036 = scalar_lea.vmem %s10, %s1035
        $region76: #{latent_forward.1} parent=67 // pred_fallthru
          _
      $region68: #{latent_forward.1} parent=5 // pred_fallthru
        _
    $region6: #{latent_forward.1} parent=1 // loop_footer
      %s24 = sadd.s32 1, %s20
    $region7: #{latent_forward.1} parent=1 // loop_footer_branch
      %19 = sbr.rel target = $region3
    $region8: #{latent_forward.1} parent=1 // loop_exit
      _
    %1037 = vsyncpa [#allocation3], 1
    %s1038 = scalar_lea.sflag [#allocation3], 1
    %1039 = vsyncpa %s1038, 1

</llo_original>
